<compile_context>
chip_gen: v7x
topology: tpu7x:2x2x1
jax: 0.10.0
libtpu: 0.0.40
codegen_flags: <defaults>
</compile_context>

<pallas_src>
import jax
import jax.numpy as jnp
from jax.experimental import pallas as pl


# ----------------------------------------------------------------------------
# Pallas kernel: whole fused forward pass in a single invocation (no grid).
# All refs are full arrays resident in VMEM; everything is 2-D dot / elementwise.
# ----------------------------------------------------------------------------
def dlinear_kernel(xz_ref, xd_ref, akron_ref, mmean_ref,
                   w1_ref, b1_ref, w2c1_ref, b2c1_ref,
                   wout_ref, bout_ref, out_ref):
    # z = [seasonal | trend] in (L*B, 2D) layout, via one 2-D MXU matmul:
    #   z = [x | 0] + kron(A, I_B) @ [-x | x]
    z = xz_ref[...] + jnp.dot(akron_ref[...], xd_ref[...],
                              preferred_element_type=jnp.float32)          # (LB, 2D)

    # Fused seasonal+trend first Linear + ReLU (block-diag W1). Dropout = identity.
    h = jnp.maximum(
        jnp.dot(z, w1_ref[...], preferred_element_type=jnp.float32)
        + b1_ref[...], 0.0)                                                # (LB, 2H)

    # Mean over the sequence dim, hoisted above the second Linear.
    hm = jnp.dot(mmean_ref[...], h, preferred_element_type=jnp.float32)    # (B, 2H)

    # Branch second Linear (block-diag) folded with the classifier first Linear + ReLU.
    c = jnp.maximum(
        jnp.dot(hm, w2c1_ref[...], preferred_element_type=jnp.float32)
        + b2c1_ref[...], 0.0)                                              # (B, H)

    # N=1 classifier head on the VPU: multiply + lane reduction (no 1-lane MXU matmul).
    out = jnp.sum(c * wout_ref[...], axis=-1, keepdims=True) + bout_ref[...]  # (B, 1)
    out_ref[...] = out.astype(out_ref.dtype)


# ----------------------------------------------------------------------------
# Host-side operator / weight packing (layout plumbing lives outside the kernel).
# ----------------------------------------------------------------------------
def make_avg_matrix(seq_len: int, kernel_size: int) -> jnp.ndarray:
    """Band matrix reproducing AvgPool1d(kernel, stride=1, pad=kernel//2,
    count_include_pad=True): out[t] = (1/kernel) * sum_{|j-t|<=pad, 0<=j<L} x[j]."""
    pad = kernel_size // 2
    idx = jnp.arange(seq_len)
    band = (jnp.abs(idx[:, None] - idx[None, :]) <= pad).astype(jnp.float32)
    return band / float(kernel_size)


def make_decomp_operators(seq_len: int, batch: int, kernel_size: int):
    """Akron: trend operator acting on rows laid out as r = l*B + b.
       Mmean: mean-over-L operator for the same row layout."""
    A = make_avg_matrix(seq_len, kernel_size)
    eye_b = jnp.eye(batch, dtype=jnp.float32)
    akron = jnp.kron(A, eye_b)                                             # (L*B, L*B)
    mmean = jnp.kron(jnp.full((1, seq_len), 1.0 / seq_len, jnp.float32),
                     eye_b)                                                # (B, L*B)
    return akron, mmean


def _block_diag2(a, b):
    top = jnp.concatenate([a, jnp.zeros((a.shape[0], b.shape[1]), a.dtype)], axis=1)
    bot = jnp.concatenate([jnp.zeros((b.shape[0], a.shape[1]), b.dtype), b], axis=1)
    return jnp.concatenate([top, bot], axis=0)


def pack_inference_params(params):
    """Fuse the two branches (block-diag) and fold branch-Linear2 into classifier-Linear1."""
    W1 = _block_diag2(params["w1s"], params["w1t"])                        # (2D, 2H)
    b1 = jnp.concatenate([params["b1s"], params["b1t"]], axis=-1)          # (1, 2H)
    W2 = _block_diag2(params["w2s"], params["w2t"])                        # (2H, 2H)
    b2 = jnp.concatenate([params["b2s"], params["b2t"]], axis=-1)          # (1, 2H)
    W2c1 = W2 @ params["wc1"]                                              # (2H, H)
    b2c1 = b2 @ params["wc1"] + params["bc1"]                              # (1, H)
    wout = params["wc2"].T                                                 # (1, H)
    bout = params["bc2"]                                                   # (1, 1)
    return dict(W1=W1, b1=b1, W2c1=W2c1, b2c1=b2c1, wout=wout, bout=bout)


@jax.jit
def dlinear_forward(x, akron, mmean, packed):
    B, L, D = x.shape
    LB = L * B
    twoH = packed["W1"].shape[1]
    H = packed["W2c1"].shape[1]

    # Wrapper-side layout plumbing: rows ordered r = l*B + b, channels = [x | 0], [-x | x].
    xt = jnp.transpose(x, (1, 0, 2)).reshape(LB, D)
    xz = jnp.concatenate([xt, jnp.zeros_like(xt)], axis=-1)                # (LB, 2D)
    xd = jnp.concatenate([-xt, xt], axis=-1)                               # (LB, 2D)
    twoD = 2 * D

    args = (xz, xd, akron, mmean,
            packed["W1"], packed["b1"], packed["W2c1"], packed["b2c1"],
            packed["wout"], packed["bout"])

    flops = (2 * LB * LB * twoD + LB * twoD          # trend matmul + add
             + 2 * LB * twoD * twoH + 2 * LB * twoH  # W1 + bias/relu
             + 2 * B * LB * twoH                     # mean-over-L matmul
             + 2 * B * twoH * H + 2 * B * H          # W2c1 + bias/relu
             + 3 * B * H)                            # VPU head
    bytes_accessed = sum(int(a.size) * a.dtype.itemsize for a in args) + B * 4

    # Single invocation (no grid): every operand is a full-array VMEM block;
    # everything fits comfortably on v5e/v6e/v7x at these shapes.
    return pl.pallas_call(
        dlinear_kernel,
        out_shape=jax.ShapeDtypeStruct((B, 1), jnp.float32),
        cost_estimate=pl.CostEstimate(flops=flops, transcendentals=0,
                                      bytes_accessed=bytes_accessed),
    )(*args)


# ----------------------------------------------------------------------------
# Pure-JAX reference: the *unfused* original forward (guards all refactorings).
# ----------------------------------------------------------------------------
def dlinear_reference(x, params, kernel_size):
    B, L, D = x.shape
    A = make_avg_matrix(L, kernel_size)
    trend = jnp.einsum("tj,bjd->btd", A, x)
    seasonal = x - trend

    def branch(z, w1, b1, w2, b2):
        h = jnp.maximum(z @ w1 + b1, 0.0)
        return (h @ w2 + b2).mean(axis=1)

    s = branch(seasonal, params["w1s"], params["b1s"], params["w2s"], params["b2s"])
    t = branch(trend, params["w1t"], params["b1t"], params["w2t"], params["b2t"])
    comb = jnp.concatenate([s, t], axis=-1)
    c = jnp.maximum(comb @ params["wc1"] + params["bc1"], 0.0)
    return c @ params["wc2"] + params["bc2"]


# ----------------------------------------------------------------------------
# Deterministic synthetic parameter init (shapes follow the module __init__).
# Linear weights stored as (in_features, out_features) so y = x @ W + b.
# ----------------------------------------------------------------------------
def init_params(key, input_dim, hidden_dim):
    ks = jax.random.split(key, 12)

    def lin(kw, kb, fan_in, fan_out):
        w = jax.random.normal(kw, (fan_in, fan_out), jnp.float32) / jnp.sqrt(fan_in)
        b = 0.02 * jax.random.normal(kb, (1, fan_out), jnp.float32)
        return w, b

    w1s, b1s = lin(ks[0], ks[1], input_dim, hidden_dim)
    w2s, b2s = lin(ks[2], ks[3], hidden_dim, hidden_dim)
    w1t, b1t = lin(ks[4], ks[5], input_dim, hidden_dim)
    w2t, b2t = lin(ks[6], ks[7], hidden_dim, hidden_dim)
    wc1, bc1 = lin(ks[8], ks[9], 2 * hidden_dim, hidden_dim)
    wc2, bc2 = lin(ks[10], ks[11], hidden_dim, 1)
    return dict(w1s=w1s, b1s=b1s, w2s=w2s, b2s=b2s,
                w1t=w1t, b1t=b1t, w2t=w2t, b2t=b2t,
                wc1=wc1, bc1=bc1, wc2=wc2, bc2=bc2)


if __name__ == "__main__":
    # Small shapes consistent with DLinearModel(input_dim=5, seq_len, hidden_dim).
    BATCH, SEQ_LEN, INPUT_DIM, HIDDEN_DIM = 2, 16, 5, 32
    KERNEL_SIZE = 25  # fixed by series_decomp(kernel_size=25)

    root = jax.random.PRNGKey(0)
    k_x, k_p = jax.random.split(root)

    x = jax.random.normal(k_x, (BATCH, SEQ_LEN, INPUT_DIM), jnp.float32)
    params = init_params(k_p, INPUT_DIM, HIDDEN_DIM)

    akron, mmean = make_decomp_operators(SEQ_LEN, BATCH, KERNEL_SIZE)
    packed = pack_inference_params(params)

    out = jax.block_until_ready(dlinear_forward(x, akron, mmean, packed))
    ref = jax.block_until_ready(dlinear_reference(x, params, KERNEL_SIZE))

    assert out.shape == (BATCH, 1), out.shape
    assert bool(jnp.all(jnp.isfinite(out)))
    assert jnp.allclose(out, ref, atol=5e-3, rtol=5e-3), (out, ref)

    print("KERNEL_OK")
</pallas_src>

<mosaic_0001>
module attributes {stable_mosaic.version = 11 : i64} {
  func.func @dlinear_kernel(%arg0: memref<32x10xf32, #tpu.memory_space<vmem>>, %arg1: memref<32x10xf32, #tpu.memory_space<vmem>>, %arg2: memref<32x32xf32, #tpu.memory_space<vmem>>, %arg3: memref<2x32xf32, #tpu.memory_space<vmem>>, %arg4: memref<10x64xf32, #tpu.memory_space<vmem>>, %arg5: memref<1x64xf32, #tpu.memory_space<vmem>>, %arg6: memref<64x32xf32, #tpu.memory_space<vmem>>, %arg7: memref<1x32xf32, #tpu.memory_space<vmem>>, %arg8: memref<1x32xf32, #tpu.memory_space<vmem>>, %arg9: memref<1x1xf32, #tpu.memory_space<vmem>>, %arg10: memref<2x1xf32, #tpu.memory_space<vmem>>) attributes {dimension_semantics = [], scalar_prefetch = 0 : i64, scratch_operands = 0 : i64, tpu.core_type = #tpu.core_type<tc>} {
    %c0 = arith.constant 0 : index
    %c0_0 = arith.constant 0 : index
    %0 = vector.load %arg0[%c0, %c0_0] : memref<32x10xf32, #tpu.memory_space<vmem>>, vector<32x10xf32>
    %c0_1 = arith.constant 0 : index
    %c0_2 = arith.constant 0 : index
    %1 = vector.load %arg2[%c0_1, %c0_2] : memref<32x32xf32, #tpu.memory_space<vmem>>, vector<32x32xf32>
    %c0_3 = arith.constant 0 : index
    %c0_4 = arith.constant 0 : index
    %2 = vector.load %arg1[%c0_3, %c0_4] : memref<32x10xf32, #tpu.memory_space<vmem>>, vector<32x10xf32>
    %cst = arith.constant dense<0.000000e+00> : vector<32x10xf32>
    %3 = tpu.matmul %1, %2, %cst {dimension_numbers = #tpu.dot_dimension_numbers<[1], [0], [0], [1], [0, 0, 1, 1], [], []>} : vector<32x32xf32>, vector<32x10xf32>, vector<32x10xf32> -> vector<32x10xf32>
    %4 = arith.addf %0, %3 : vector<32x10xf32>
    %c0_5 = arith.constant 0 : index
    %c0_6 = arith.constant 0 : index
    %5 = vector.load %arg4[%c0_5, %c0_6] : memref<10x64xf32, #tpu.memory_space<vmem>>, vector<10x64xf32>
    %cst_7 = arith.constant dense<0.000000e+00> : vector<32x64xf32>
    %6 = tpu.matmul %4, %5, %cst_7 {dimension_numbers = #tpu.dot_dimension_numbers<[1], [0], [0], [1], [0, 0, 1, 1], [], []>} : vector<32x10xf32>, vector<10x64xf32>, vector<32x64xf32> -> vector<32x64xf32>
    %c0_8 = arith.constant 0 : index
    %c0_9 = arith.constant 0 : index
    %7 = vector.load %arg5[%c0_8, %c0_9] : memref<1x64xf32, #tpu.memory_space<vmem>>, vector<1x64xf32>
    %8 = vector.broadcast %7 : vector<1x64xf32> to vector<32x64xf32>
    %9 = arith.addf %6, %8 : vector<32x64xf32>
    %cst_10 = arith.constant 0.000000e+00 : f32
    %10 = vector.broadcast %cst_10 : f32 to vector<32x64xf32>
    %11 = arith.maximumf %9, %10 : vector<32x64xf32>
    %c0_11 = arith.constant 0 : index
    %c0_12 = arith.constant 0 : index
    %12 = vector.load %arg3[%c0_11, %c0_12] : memref<2x32xf32, #tpu.memory_space<vmem>>, vector<2x32xf32>
    %cst_13 = arith.constant dense<0.000000e+00> : vector<2x64xf32>
    %13 = tpu.matmul %12, %11, %cst_13 {dimension_numbers = #tpu.dot_dimension_numbers<[1], [0], [0], [1], [0, 0, 1, 1], [], []>} : vector<2x32xf32>, vector<32x64xf32>, vector<2x64xf32> -> vector<2x64xf32>
    %c0_14 = arith.constant 0 : index
    %c0_15 = arith.constant 0 : index
    %14 = vector.load %arg6[%c0_14, %c0_15] : memref<64x32xf32, #tpu.memory_space<vmem>>, vector<64x32xf32>
    %cst_16 = arith.constant dense<0.000000e+00> : vector<2x32xf32>
    %15 = tpu.matmul %13, %14, %cst_16 {dimension_numbers = #tpu.dot_dimension_numbers<[1], [0], [0], [1], [0, 0, 1, 1], [], []>} : vector<2x64xf32>, vector<64x32xf32>, vector<2x32xf32> -> vector<2x32xf32>
    %c0_17 = arith.constant 0 : index
    %c0_18 = arith.constant 0 : index
    %16 = vector.load %arg7[%c0_17, %c0_18] : memref<1x32xf32, #tpu.memory_space<vmem>>, vector<1x32xf32>
    %17 = vector.broadcast %16 : vector<1x32xf32> to vector<2x32xf32>
    %18 = arith.addf %15, %17 : vector<2x32xf32>
    %cst_19 = arith.constant 0.000000e+00 : f32
    %19 = vector.broadcast %cst_19 : f32 to vector<2x32xf32>
    %20 = arith.maximumf %18, %19 : vector<2x32xf32>
    %c0_20 = arith.constant 0 : index
    %c0_21 = arith.constant 0 : index
    %21 = vector.load %arg8[%c0_20, %c0_21] : memref<1x32xf32, #tpu.memory_space<vmem>>, vector<1x32xf32>
    %22 = vector.broadcast %21 : vector<1x32xf32> to vector<2x32xf32>
    %23 = arith.mulf %20, %22 : vector<2x32xf32>
    %cst_22 = arith.constant dense<0.000000e+00> : vector<2xf32>
    %24 = vector.multi_reduction <add>, %23, %cst_22 [1] : vector<2x32xf32> to vector<2xf32>
    %25 = vector.shape_cast %24 : vector<2xf32> to vector<2x1xf32>
    %c0_23 = arith.constant 0 : index
    %c0_24 = arith.constant 0 : index
    %26 = vector.load %arg9[%c0_23, %c0_24] : memref<1x1xf32, #tpu.memory_space<vmem>>, vector<1x1xf32>
    %27 = vector.broadcast %26 : vector<1x1xf32> to vector<2x1xf32>
    %28 = arith.addf %25, %27 : vector<2x1xf32>
    %c0_25 = arith.constant 0 : index
    %c0_26 = arith.constant 0 : index
    %29 = vector.load %arg10[%c0_25, %c0_26] : memref<2x1xf32, #tpu.memory_space<vmem>>, vector<2x1xf32>
    tpu.vector_store %arg10[%c0_25, %c0_26], %28 {strides = array<i32>} : memref<2x1xf32, #tpu.memory_space<vmem>>, vector<2x1xf32>,
    return
  }
}

</mosaic_0001>

<llo_original>
// kernel: neg.1
$region0: #{neg.1}
  #allocation0 [shape = 's32[1]{0}', space=sflag, size = 0x4, scoped, tag = 'scoped memory for neg.1']
  %s0 = inlined_call_operand.vmem [shape: f32[32,5], index: 0, kind: input, shape index: {}]
  %s1 = inlined_call_operand.vmem [shape: f32[32,5], index: 1, kind: output, shape index: {}]
  %v2 = vld [vmem:[%s0] sm:$0xff]
  %3 = xla_tuple %v2
  %4 = xla_tuple %3
  %v5 = vxor.u32 %v2, 2147483648
  %6 = xla_tuple %v5
  %7 = vst [vmem:[%s1] sm:$0xff] %v5
  %s8 = scalar_lea.vmem %s0, 8
  %v9 = vld [vmem:[%s8] sm:$0xff]
  %10 = xla_tuple %v9
  %11 = xla_tuple %10
  %v12 = vxor.u32 %v9, 2147483648
  %13 = xla_tuple %v12
  %s14 = scalar_lea.vmem %s1, 8
  %15 = vst [vmem:[%s14] sm:$0xff] %v12
  %s16 = scalar_lea.vmem %s0, 16
  %v17 = vld [vmem:[%s16] sm:$0xff]
  %18 = xla_tuple %v17
  %19 = xla_tuple %18
  %v20 = vxor.u32 %v17, 2147483648
  %21 = xla_tuple %v20
  %s22 = scalar_lea.vmem %s1, 16
  %23 = vst [vmem:[%s22] sm:$0xff] %v20
  %s24 = scalar_lea.vmem %s0, 24
  %v25 = vld [vmem:[%s24] sm:$0xff]
  %26 = xla_tuple %v25
  %27 = xla_tuple %26
  %v28 = vxor.u32 %v25, 2147483648
  %29 = xla_tuple %v28
  %s30 = scalar_lea.vmem %s1, 24
  %31 = vst [vmem:[%s30] sm:$0xff] %v28

// kernel: dlinear_forward.1
$region0: #{dlinear_forward.1}
  #allocation0 [shape = 'u32[]', space=smem, size = 0x4, offset = 0x4, fixed_abs, tag = 'smem constant byte address 0x4 - core index']
  #allocation1 [shape = 'u32[144,128]{1,0:T(1,128)}', space=vmem, size = 0x12000, scoped, tag = 'internal scratch']
  #allocation2 [shape = 'f32[1,1]{1,0:T(1,128)S(1)}', space=vmem, size = 0x200, scoped, tag = 'scoped memory for dlinear_forward.1']
  %s0 = inlined_call_operand.vmem [shape: f32[32,10], index: 0, kind: input, shape index: {}]
  %s1 = inlined_call_operand.vmem [shape: f32[32,10], index: 1, kind: input, shape index: {}]
  %s2 = inlined_call_operand.vmem [shape: f32[32,32], index: 2, kind: input, shape index: {}]
  %s3 = inlined_call_operand.vmem [shape: f32[2,32], index: 3, kind: input, shape index: {}]
  %s4 = inlined_call_operand.vmem [shape: f32[10,64], index: 4, kind: input, shape index: {}]
  %s5 = inlined_call_operand.vmem [shape: f32[1,64], index: 5, kind: input, shape index: {}]
  %s6 = inlined_call_operand.vmem [shape: f32[64,32], index: 6, kind: input, shape index: {}]
  %s7 = inlined_call_operand.vmem [shape: f32[1,32], index: 7, kind: input, shape index: {}]
  %s8 = inlined_call_operand.vmem [shape: f32[1,32], index: 8, kind: input, shape index: {}]
  %s9 = inlined_call_operand.<no memory space> [shape: f32[1,1], index: 9, kind: input, shape index: {}]
  %s10 = inlined_call_operand.vmem [shape: f32[2,1], index: 10, kind: output, shape index: {}]
  %s11 = sld [smem:[#allocation0]]
  $region50: #{dlinear_forward.1} parent=0
    _
  %s13 = ssub.s32 1, %s11
  %s14 = scalar_select 0, %s13, %s11
  %v15 = vstv %s9
  %16 = vst [vmem:[#allocation2] sm:$0x1] %v15
  // Predicated region
  $region2: #{dlinear_forward.1} parent=0 // pred_check
    _
  $region3: #{dlinear_forward.1} parent=0 // pred_check_branch
    %18 = sbr.rel (0) target = $region5
  $region4: #{dlinear_forward.1} parent=0 // pred_region
    _
  $region5: #{dlinear_forward.1} parent=0 // pred_fallthru
    _
  // Predicated region
  $region6: #{dlinear_forward.1} parent=0 // pred_check
    _
  $region7: #{dlinear_forward.1} parent=0 // pred_check_branch
    %20 = sbr.rel (0) target = $region9
  $region8: #{dlinear_forward.1} parent=0 // pred_region
    _
  $region9: #{dlinear_forward.1} parent=0 // pred_fallthru
    _
  // Predicated region
  $region10: #{dlinear_forward.1} parent=0 // pred_check
    _
  $region11: #{dlinear_forward.1} parent=0 // pred_check_branch
    %22 = sbr.rel (0) target = $region13
  $region12: #{dlinear_forward.1} parent=0 // pred_region
    _
  $region13: #{dlinear_forward.1} parent=0 // pred_fallthru
    _
  // Predicated region
  $region14: #{dlinear_forward.1} parent=0 // pred_check
    _
  $region15: #{dlinear_forward.1} parent=0 // pred_check_branch
    %24 = sbr.rel (0) target = $region17
  $region16: #{dlinear_forward.1} parent=0 // pred_region
    _
  $region17: #{dlinear_forward.1} parent=0 // pred_fallthru
    _
  // Predicated region
  $region18: #{dlinear_forward.1} parent=0 // pred_check
    _
  $region19: #{dlinear_forward.1} parent=0 // pred_check_branch
    %26 = sbr.rel (0) target = $region21
  $region20: #{dlinear_forward.1} parent=0 // pred_region
    _
  $region21: #{dlinear_forward.1} parent=0 // pred_fallthru
    _
  // Predicated region
  $region22: #{dlinear_forward.1} parent=0 // pred_check
    _
  $region23: #{dlinear_forward.1} parent=0 // pred_check_branch
    %28 = sbr.rel (0) target = $region25
  $region24: #{dlinear_forward.1} parent=0 // pred_region
    _
  $region25: #{dlinear_forward.1} parent=0 // pred_fallthru
    _
  // Predicated region
  $region26: #{dlinear_forward.1} parent=0 // pred_check
    _
  $region27: #{dlinear_forward.1} parent=0 // pred_check_branch
    %30 = sbr.rel (0) target = $region29
  $region28: #{dlinear_forward.1} parent=0 // pred_region
    _
  $region29: #{dlinear_forward.1} parent=0 // pred_fallthru
    _
  // Predicated region
  $region30: #{dlinear_forward.1} parent=0 // pred_check
    _
  $region31: #{dlinear_forward.1} parent=0 // pred_check_branch
    %32 = sbr.rel (0) target = $region33
  $region32: #{dlinear_forward.1} parent=0 // pred_region
    _
  $region33: #{dlinear_forward.1} parent=0 // pred_fallthru
    _
  // Predicated region
  $region34: #{dlinear_forward.1} parent=0 // pred_check
    _
  $region35: #{dlinear_forward.1} parent=0 // pred_check_branch
    %34 = sbr.rel (0) target = $region37
  $region36: #{dlinear_forward.1} parent=0 // pred_region
    _
  $region37: #{dlinear_forward.1} parent=0 // pred_fallthru
    _
  // Predicated region
  $region38: #{dlinear_forward.1} parent=0 // pred_check
    _
  $region39: #{dlinear_forward.1} parent=0 // pred_check_branch
    %36 = sbr.rel (0) target = $region41
  $region40: #{dlinear_forward.1} parent=0 // pred_region
    _
  $region41: #{dlinear_forward.1} parent=0 // pred_fallthru
    _
  %v37 = vld [vmem:[%s0] sm:$0xff]
  %v38 = vld [vmem:[%s0 + $0x8] sm:$0xff]
  %v39 = vld [vmem:[%s0 + $0x10] sm:$0xff]
  %v40 = vld [vmem:[%s0 + $0x18] sm:$0xff]
  %v41 = vld [vmem:[%s2] sm:$0xff]
  %v42 = vld [vmem:[%s2 + $0x8] sm:$0xff]
  %v43 = vld [vmem:[%s2 + $0x10] sm:$0xff]
  %v44 = vld [vmem:[%s2 + $0x18] sm:$0xff]
  %v45 = vld [vmem:[%s1] sm:$0xff]
  %v46 = vld [vmem:[%s1 + $0x8] sm:$0xff]
  %v47 = vld [vmem:[%s1 + $0x10] sm:$0xff]
  %v48 = vld [vmem:[%s1 + $0x18] sm:$0xff]
  %vm49 = vcmask 261120
  %v51 = vsel %vm49, %v41, 0
  %v54 = vsel %vm49, %v42, 0
  %v57 = vsel %vm49, %v43, 0
  %v60 = vsel %vm49, %v44, 0
  %62 = vmatprep.subr.mxu0 0.0
  %63 = vmatpush1.msra.mxu0 %v45
  %64 = vmatprep.subr.mxu0 0.0
  %65 = vmatpush1.msra.mxu0 %v46
  %66 = vmatprep.subr.mxu0 0.0
  %67 = vmatpush1.msra.mxu0 %v47
  %68 = vmatprep.subr.mxu0 0.0
  %69 = vmatpush1.msra.mxu0 %v48
  %70 = vmatprep.subr.mxu0 0.0
  %71 = vmatpush1.msra.mxu0 0.0
  %72 = vmatprep.subr.mxu0 0.0
  %73 = vmatpush1.msra.mxu0 0.0
  %74 = vmatprep.subr.mxu0 0.0
  %75 = vmatpush1.msra.mxu0 0.0
  %76 = vmatprep.subr.mxu0 0.0
  %77 = vmatpush1.msra.mxu0 0.0
  %78 = vmatprep.subr.mxu0 0.0
  %79 = vmatpush1.msra.mxu0 0.0
  %80 = vmatprep.subr.mxu0 0.0
  %81 = vmatpush1.msra.mxu0 0.0
  %82 = vmatprep.subr.mxu0 0.0
  %83 = vmatpush1.msra.mxu0 0.0
  %84 = vmatprep.subr.mxu0 0.0
  %85 = vmatpush1.msra.mxu0 0.0
  %86 = vmatprep.subr.mxu0 0.0
  %87 = vmatpush1.msra.mxu0 0.0
  %88 = vmatprep.subr.mxu0 0.0
  %89 = vmatpush1.msra.mxu0 0.0
  %90 = vmatprep.subr.mxu0 0.0
  %91 = vmatpush1.msra.mxu0 0.0
  %92 = vmatprep.subr.mxu0 0.0
  %93 = vmatpush1.msra.mxu0 0.0
  %94 = vmatprep.subr.mxu0 0.0
  %95 = vmatpush1.msra.mxu0 0.0
  %96 = vmatprep.subr.mxu0 0.0
  %97 = vmatpush1.msra.mxu0 0.0
  %98 = vmatprep.subr.mxu0 0.0
  %99 = vmatpush1.msra.mxu0 0.0
  %100 = vmatprep.subr.mxu0 0.0
  %101 = vmatpush1.msra.mxu0 0.0
  %102 = vmatprep.subr.mxu0 0.0
  %103 = vmatpush1.msra.mxu0 0.0
  %104 = vmatprep.subr.mxu0 0.0
  %105 = vmatpush1.msra.mxu0 0.0
  %106 = vmatprep.subr.mxu0 0.0
  %107 = vmatpush1.msra.mxu0 0.0
  %108 = vmatprep.subr.mxu0 0.0
  %109 = vmatpush1.msra.mxu0 0.0
  %110 = vmatprep.subr.mxu0 0.0
  %111 = vmatpush1.msra.mxu0 0.0
  %112 = vmatprep.subr.mxu0 0.0
  %113 = vmatpush1.msra.mxu0 0.0
  %114 = vmatprep.subr.mxu0 0.0
  %115 = vmatpush1.msra.mxu0 0.0
  %116 = vmatprep.subr.mxu0 0.0
  %117 = vmatpush1.msra.mxu0 0.0
  %118 = vmatprep.subr.mxu0 0.0
  %119 = vmatpush1.msra.mxu0 0.0
  %120 = vmatprep.subr.mxu0 0.0
  %121 = vmatpush1.msra.mxu0 0.0
  %122 = vmatprep.subr.mxu0 0.0
  %123 = vmatpush1.msra.mxu0 0.0
  %124 = vmatprep.subr.mxu0 0.0
  %125 = vmatpush1.msra.mxu0 0.0
  %126 = vmatprep.mubr.f32.mxu0 0.0
  %127 = vmatmul.mubr.f32.gmra.mrb[0].mxu0 %v51
  %v128 = vpop.f32.mrb[0].mxu0
  %v129 = vadd.f32 0.0, %v128
  %v130 = vpop.f32.mrb[0].mxu0
  %131 = vmatprep.mubr.f32.mxu0 0.0
  %132 = vmatmul.mubr.f32.gmra.mrb[0].mxu0 %v54
  %v133 = vpop.f32.mrb[0].mxu0
  %v134 = vadd.f32 0.0, %v133
  %v135 = vpop.f32.mrb[0].mxu0
  %136 = vmatprep.mubr.f32.mxu0 0.0
  %137 = vmatmul.mubr.f32.gmra.mrb[0].mxu0 %v57
  %v138 = vpop.f32.mrb[0].mxu0
  %v139 = vadd.f32 0.0, %v138
  %v140 = vpop.f32.mrb[0].mxu0
  %141 = vmatprep.mubr.f32.mxu0 0.0
  %142 = vmatmul.mubr.f32.gmra.mrb[0].mxu0 %v60
  %v143 = vpop.f32.mrb[0].mxu0
  %v144 = vadd.f32 0.0, %v143
  %v145 = vpop.f32.mrb[0].mxu0
  %146 = vdwg.mxu0
  %v147 = vadd.f32 %v37, %v129
  %v148 = vadd.f32 %v38, %v134
  %v149 = vadd.f32 %v39, %v139
  %v150 = vadd.f32 %v40, %v144
  %v151 = vld [vmem:[%s4] sm:$0xff]
  %v152 = vld [vmem:[%s4 + $0x8] sm:$0x3]
  %v153 = vld [vmem:[%s5] sm:$0x1]
  %v155 = vlaneseq
  %v156 = vshrl.u32 %v155, 7
  %v157 = vsub.s32 0, %v156
  %v158 = vrot.slane %v153, %v157
  %vm160 = vcmask 80896
  %v162 = vsel %vm160, %v147, 0
  %v165 = vsel %vm160, %v148, 0
  %v168 = vsel %vm160, %v149, 0
  %v171 = vsel %vm160, %v150, 0
  %vm173 = vcmask 1041408
  %v175 = vsel %vm173, %v152, 0
  %177 = vmatprep.subr.mxu0 0.0
  %178 = vmatpush1.msra.mxu0 %v151
  %179 = vmatprep.subr.mxu0 0.0
  %180 = vmatpush1.msra.mxu0 %v175
  %181 = vmatprep.subr.mxu0 0.0
  %182 = vmatpush1.msra.mxu0 0.0
  %183 = vmatprep.subr.mxu0 0.0
  %184 = vmatpush1.msra.mxu0 0.0
  %185 = vmatprep.subr.mxu0 0.0
  %186 = vmatpush1.msra.mxu0 0.0
  %187 = vmatprep.subr.mxu0 0.0
  %188 = vmatpush1.msra.mxu0 0.0
  %189 = vmatprep.subr.mxu0 0.0
  %190 = vmatpush1.msra.mxu0 0.0
  %191 = vmatprep.subr.mxu0 0.0
  %192 = vmatpush1.msra.mxu0 0.0
  %193 = vmatprep.subr.mxu0 0.0
  %194 = vmatpush1.msra.mxu0 0.0
  %195 = vmatprep.subr.mxu0 0.0
  %196 = vmatpush1.msra.mxu0 0.0
  %197 = vmatprep.subr.mxu0 0.0
  %198 = vmatpush1.msra.mxu0 0.0
  %199 = vmatprep.subr.mxu0 0.0
  %200 = vmatpush1.msra.mxu0 0.0
  %201 = vmatprep.subr.mxu0 0.0
  %202 = vmatpush1.msra.mxu0 0.0
  %203 = vmatprep.subr.mxu0 0.0
  %204 = vmatpush1.msra.mxu0 0.0
  %205 = vmatprep.subr.mxu0 0.0
  %206 = vmatpush1.msra.mxu0 0.0
  %207 = vmatprep.subr.mxu0 0.0
  %208 = vmatpush1.msra.mxu0 0.0
  %209 = vmatprep.subr.mxu0 0.0
  %210 = vmatpush1.msra.mxu0 0.0
  %211 = vmatprep.subr.mxu0 0.0
  %212 = vmatpush1.msra.mxu0 0.0
  %213 = vmatprep.subr.mxu0 0.0
  %214 = vmatpush1.msra.mxu0 0.0
  %215 = vmatprep.subr.mxu0 0.0
  %216 = vmatpush1.msra.mxu0 0.0
  %217 = vmatprep.subr.mxu0 0.0
  %218 = vmatpush1.msra.mxu0 0.0
  %219 = vmatprep.subr.mxu0 0.0
  %220 = vmatpush1.msra.mxu0 0.0
  %221 = vmatprep.subr.mxu0 0.0
  %222 = vmatpush1.msra.mxu0 0.0
  %223 = vmatprep.subr.mxu0 0.0
  %224 = vmatpush1.msra.mxu0 0.0
  %225 = vmatprep.subr.mxu0 0.0
  %226 = vmatpush1.msra.mxu0 0.0
  %227 = vmatprep.subr.mxu0 0.0
  %228 = vmatpush1.msra.mxu0 0.0
  %229 = vmatprep.subr.mxu0 0.0
  %230 = vmatpush1.msra.mxu0 0.0
  %231 = vmatprep.subr.mxu0 0.0
  %232 = vmatpush1.msra.mxu0 0.0
  %233 = vmatprep.subr.mxu0 0.0
  %234 = vmatpush1.msra.mxu0 0.0
  %235 = vmatprep.subr.mxu0 0.0
  %236 = vmatpush1.msra.mxu0 0.0
  %237 = vmatprep.subr.mxu0 0.0
  %238 = vmatpush1.msra.mxu0 0.0
  %239 = vmatprep.subr.mxu0 0.0
  %240 = vmatpush1.msra.mxu0 0.0
  %241 = vmatprep.mubr.f32.mxu0 0.0
  %242 = vmatmul.mubr.f32.gmra.mrb[0].mxu0 %v162
  %v243 = vpop.f32.mrb[0].mxu0
  %v244 = vadd.f32 %v158, %v243
  %v245 = vpop.f32.mrb[0].mxu0
  %246 = vmatprep.mubr.f32.mxu0 0.0
  %247 = vmatmul.mubr.f32.gmra.mrb[0].mxu0 %v165
  %v248 = vpop.f32.mrb[0].mxu0
  %v249 = vadd.f32 %v158, %v248
  %v250 = vpop.f32.mrb[0].mxu0
  %251 = vmatprep.mubr.f32.mxu0 0.0
  %252 = vmatmul.mubr.f32.gmra.mrb[0].mxu0 %v168
  %v253 = vpop.f32.mrb[0].mxu0
  %v254 = vadd.f32 %v158, %v253
  %v255 = vpop.f32.mrb[0].mxu0
  %256 = vmatprep.mubr.f32.mxu0 0.0
  %257 = vmatmul.mubr.f32.gmra.mrb[0].mxu0 %v171
  %v258 = vpop.f32.mrb[0].mxu0
  %v259 = vadd.f32 %v158, %v258
  %v260 = vpop.f32.mrb[0].mxu0
  %261 = vdwg.mxu0
  %v262 = vmax.f32 %v244, 0.0
  %v263 = vmax.f32 %v249, 0.0
  %v264 = vmax.f32 %v254, 0.0
  %v265 = vmax.f32 %v259, 0.0
  %v266 = vld [vmem:[%s3] sm:$0x3]
  %v268 = vsel %vm49, %v266, 0
  %270 = vmatprep.subr.mxu0 0.0
  %271 = vmatpush1.msra.mxu0 %v262
  %272 = vmatprep.subr.mxu0 0.0
  %273 = vmatpush1.msra.mxu0 %v263
  %274 = vmatprep.subr.mxu0 0.0
  %275 = vmatpush1.msra.mxu0 %v264
  %276 = vmatprep.subr.mxu0 0.0
  %277 = vmatpush1.msra.mxu0 %v265
  %278 = vmatprep.subr.mxu0 0.0
  %279 = vmatpush1.msra.mxu0 0.0
  %280 = vmatprep.subr.mxu0 0.0
  %281 = vmatpush1.msra.mxu0 0.0
  %282 = vmatprep.subr.mxu0 0.0
  %283 = vmatpush1.msra.mxu0 0.0
  %284 = vmatprep.subr.mxu0 0.0
  %285 = vmatpush1.msra.mxu0 0.0
  %286 = vmatprep.subr.mxu0 0.0
  %287 = vmatpush1.msra.mxu0 0.0
  %288 = vmatprep.subr.mxu0 0.0
  %289 = vmatpush1.msra.mxu0 0.0
  %290 = vmatprep.subr.mxu0 0.0
  %291 = vmatpush1.msra.mxu0 0.0
  %292 = vmatprep.subr.mxu0 0.0
  %293 = vmatpush1.msra.mxu0 0.0
  %294 = vmatprep.subr.mxu0 0.0
  %295 = vmatpush1.msra.mxu0 0.0
  %296 = vmatprep.subr.mxu0 0.0
  %297 = vmatpush1.msra.mxu0 0.0
  %298 = vmatprep.subr.mxu0 0.0
  %299 = vmatpush1.msra.mxu0 0.0
  %300 = vmatprep.subr.mxu0 0.0
  %301 = vmatpush1.msra.mxu0 0.0
  %302 = vmatprep.subr.mxu0 0.0
  %303 = vmatpush1.msra.mxu0 0.0
  %304 = vmatprep.subr.mxu0 0.0
  %305 = vmatpush1.msra.mxu0 0.0
  %306 = vmatprep.subr.mxu0 0.0
  %307 = vmatpush1.msra.mxu0 0.0
  %308 = vmatprep.subr.mxu0 0.0
  %309 = vmatpush1.msra.mxu0 0.0
  %310 = vmatprep.subr.mxu0 0.0
  %311 = vmatpush1.msra.mxu0 0.0
  %312 = vmatprep.subr.mxu0 0.0
  %313 = vmatpush1.msra.mxu0 0.0
  %314 = vmatprep.subr.mxu0 0.0
  %315 = vmatpush1.msra.mxu0 0.0
  %316 = vmatprep.subr.mxu0 0.0
  %317 = vmatpush1.msra.mxu0 0.0
  %318 = vmatprep.subr.mxu0 0.0
  %319 = vmatpush1.msra.mxu0 0.0
  %320 = vmatprep.subr.mxu0 0.0
  %321 = vmatpush1.msra.mxu0 0.0
  %322 = vmatprep.subr.mxu0 0.0
  %323 = vmatpush1.msra.mxu0 0.0
  %324 = vmatprep.subr.mxu0 0.0
  %325 = vmatpush1.msra.mxu0 0.0
  %326 = vmatprep.subr.mxu0 0.0
  %327 = vmatpush1.msra.mxu0 0.0
  %328 = vmatprep.subr.mxu0 0.0
  %329 = vmatpush1.msra.mxu0 0.0
  %330 = vmatprep.subr.mxu0 0.0
  %331 = vmatpush1.msra.mxu0 0.0
  %332 = vmatprep.subr.mxu0 0.0
  %333 = vmatpush1.msra.mxu0 0.0
  %334 = vmatprep.mubr.f32.mxu0 0.0
  %335 = vmatmul.mubr.f32.gmra.mrb[0].mxu0 %v268
  %v336 = vpop.f32.mrb[0].mxu0
  %v337 = vadd.f32 0.0, %v336
  %v338 = vpop.f32.mrb[0].mxu0
  %339 = vdwg.mxu0
  %v340 = vld [vmem:[%s6] sm:$0xff]
  %v341 = vld [vmem:[%s6 + $0x8] sm:$0xff]
  %v342 = vld [vmem:[%s6 + $0x10] sm:$0xff]
  %v343 = vld [vmem:[%s6 + $0x18] sm:$0xff]
  %v344 = vld [vmem:[%s6 + $0x20] sm:$0xff]
  %v345 = vld [vmem:[%s6 + $0x28] sm:$0xff]
  %v346 = vld [vmem:[%s6 + $0x30] sm:$0xff]
  %v347 = vld [vmem:[%s6 + $0x38] sm:$0xff]
  %v348 = vld [vmem:[%s7] sm:$0x1]
  %v350 = vlaneseq
  %v351 = vshrl.u32 %v350, 7
  %v352 = vsub.s32 0, %v351
  %v353 = vrot.slane %v348, %v352
  %vm355 = vcmask 523264
  %v357 = vsel %vm355, %v337, 0
  %359 = vmatprep.subr.mxu0 0.0
  %360 = vmatpush1.msra.mxu0 %v340
  %361 = vmatprep.subr.mxu0 0.0
  %362 = vmatpush1.msra.mxu0 %v341
  %363 = vmatprep.subr.mxu0 0.0
  %364 = vmatpush1.msra.mxu0 %v342
  %365 = vmatprep.subr.mxu0 0.0
  %366 = vmatpush1.msra.mxu0 %v343
  %367 = vmatprep.subr.mxu0 0.0
  %368 = vmatpush1.msra.mxu0 %v344
  %369 = vmatprep.subr.mxu0 0.0
  %370 = vmatpush1.msra.mxu0 %v345
  %371 = vmatprep.subr.mxu0 0.0
  %372 = vmatpush1.msra.mxu0 %v346
  %373 = vmatprep.subr.mxu0 0.0
  %374 = vmatpush1.msra.mxu0 %v347
  %375 = vmatprep.subr.mxu0 0.0
  %376 = vmatpush1.msra.mxu0 0.0
  %377 = vmatprep.subr.mxu0 0.0
  %378 = vmatpush1.msra.mxu0 0.0
  %379 = vmatprep.subr.mxu0 0.0
  %380 = vmatpush1.msra.mxu0 0.0
  %381 = vmatprep.subr.mxu0 0.0
  %382 = vmatpush1.msra.mxu0 0.0
  %383 = vmatprep.subr.mxu0 0.0
  %384 = vmatpush1.msra.mxu0 0.0
  %385 = vmatprep.subr.mxu0 0.0
  %386 = vmatpush1.msra.mxu0 0.0
  %387 = vmatprep.subr.mxu0 0.0
  %388 = vmatpush1.msra.mxu0 0.0
  %389 = vmatprep.subr.mxu0 0.0
  %390 = vmatpush1.msra.mxu0 0.0
  %391 = vmatprep.subr.mxu0 0.0
  %392 = vmatpush1.msra.mxu0 0.0
  %393 = vmatprep.subr.mxu0 0.0
  %394 = vmatpush1.msra.mxu0 0.0
  %395 = vmatprep.subr.mxu0 0.0
  %396 = vmatpush1.msra.mxu0 0.0
  %397 = vmatprep.subr.mxu0 0.0
  %398 = vmatpush1.msra.mxu0 0.0
  %399 = vmatprep.subr.mxu0 0.0
  %400 = vmatpush1.msra.mxu0 0.0
  %401 = vmatprep.subr.mxu0 0.0
  %402 = vmatpush1.msra.mxu0 0.0
  %403 = vmatprep.subr.mxu0 0.0
  %404 = vmatpush1.msra.mxu0 0.0
  %405 = vmatprep.subr.mxu0 0.0
  %406 = vmatpush1.msra.mxu0 0.0
  %407 = vmatprep.subr.mxu0 0.0
  %408 = vmatpush1.msra.mxu0 0.0
  %409 = vmatprep.subr.mxu0 0.0
  %410 = vmatpush1.msra.mxu0 0.0
  %411 = vmatprep.subr.mxu0 0.0
  %412 = vmatpush1.msra.mxu0 0.0
  %413 = vmatprep.subr.mxu0 0.0
  %414 = vmatpush1.msra.mxu0 0.0
  %415 = vmatprep.subr.mxu0 0.0
  %416 = vmatpush1.msra.mxu0 0.0
  %417 = vmatprep.subr.mxu0 0.0
  %418 = vmatpush1.msra.mxu0 0.0
  %419 = vmatprep.subr.mxu0 0.0
  %420 = vmatpush1.msra.mxu0 0.0
  %421 = vmatprep.subr.mxu0 0.0
  %422 = vmatpush1.msra.mxu0 0.0
  %423 = vmatprep.mubr.f32.mxu0 0.0
  %424 = vmatmul.mubr.f32.gmra.mrb[0].mxu0 %v357
  %v425 = vpop.f32.mrb[0].mxu0
  %v426 = vadd.f32 %v353, %v425
  %v427 = vpop.f32.mrb[0].mxu0
  %428 = vdwg.mxu0
  %v429 = vmax.f32 %v426, 0.0
  %v430 = vld [vmem:[%s8] sm:$0x1]
  %v432 = vlaneseq
  %v433 = vshrl.u32 %v432, 7
  %v434 = vsub.s32 0, %v433
  %v435 = vrot.slane %v430, %v434
  %v437 = vmul.f32 %v429, %v435
  %vm438 = vcmask 254976
  %v439 = vsel %vm438, %v437, 0.0
  %440 = vadd.xlane.f32.xlu0 %v439
  %v441 = vpop.xlane.xlu0 %440
  %v442 = vld [vmem:[#allocation2] sm:$0x1]
  %v444 = vlaneseq
  %v445 = vshrl.u32 %v444, 7
  %v446 = vsub.s32 0, %v445
  %v447 = vrot.slane %v442, %v446
  %v449 = vadd.f32 %v441, %v447
  %vm450 = vcmask 1024
  %451 = vst.msk [vmem:[%s10] sm:$0x3] %vm450, %v449
  // Predicated region
  $region42: #{dlinear_forward.1} parent=0 // pred_check
    _
  $region43: #{dlinear_forward.1} parent=0 // pred_check_branch
    %453 = sbr.rel (0) target = $region45
  $region44: #{dlinear_forward.1} parent=0 // pred_region
    _
  $region45: #{dlinear_forward.1} parent=0 // pred_fallthru
    _
  // Predicated region
  $region46: #{dlinear_forward.1} parent=0 // pred_check
    _
  $region47: #{dlinear_forward.1} parent=0 // pred_check_branch
    %455 = sbr.rel (0) target = $region49
  $region48: #{dlinear_forward.1} parent=0 // pred_region
    _
  $region49: #{dlinear_forward.1} parent=0 // pred_fallthru
    _

</llo_original>
